<compile_context>
chip_gen: v7x
topology: tpu7x:2x2x1
jax: 0.10.0
libtpu: 0.0.40
codegen_flags: <defaults>
</compile_context>

<pallas_src>
import functools

import jax
import jax.numpy as jnp
from jax import lax
from jax.experimental import pallas as pl
from jax.experimental.pallas import tpu as pltpu

_EPS = 1e-5                               # PyTorch default eps
_BLOCK_BYTES_BUDGET = 4 * 1024 * 1024     # per in/out block; x2 streams x2 buffers ~ 16 MiB
_VMEM_LIMIT_BYTES = 32 * 1024 * 1024      # raises v5e's 16 MiB default, safe on v6e/v7x


def _pick_tile(dim, max_units, align=1):
    """Largest tile that divides `dim`, is <= max_units and is a multiple of
    `align` (TPU sublane constraint for tiled layout dims).  Falls back to the
    full dim if no aligned divisor fits the budget (best-effort sizing)."""
    max_units = max(1, max_units)
    if dim <= max_units:
        return dim
    t = (min(dim, max_units) // align) * align
    while t >= align:
        if dim % t == 0:
            return t
        t -= align
    return dim


# ---------------------------------------------------------------------------
# Kernels
# ---------------------------------------------------------------------------

def _batch_norm_kernel(x_ref, gamma_ref, beta_ref, o_ref):
    """BatchNorm1d (training mode): stats per channel over (N, L).

    x_ref/o_ref: (N, TC, L)   gamma_ref/beta_ref: (TC, 1) float32
    """
    x = x_ref[...].astype(jnp.float32)
    inv_count = 1.0 / (x.shape[0] * x.shape[2])
    s = jnp.sum(x, axis=2, keepdims=True)                  # (N, TC, 1)
    mean = jnp.sum(s, axis=0, keepdims=True) * inv_count   # (1, TC, 1)
    xc = x - mean
    sq = jnp.sum(xc * xc, axis=2, keepdims=True)
    var = jnp.sum(sq, axis=0, keepdims=True) * inv_count   # biased variance
    inv = lax.rsqrt(var + _EPS)
    g = gamma_ref[...][None]                                # (1, TC, 1)
    b = beta_ref[...][None]
    o_ref[...] = (xc * (inv * g) + b).astype(o_ref.dtype)


def _inst_norm_kernel(x_ref, gamma_ref, beta_ref, o_ref):
    """InstanceNorm1d: stats per (n, c) over L.

    x_ref/o_ref: (TN, TC, L)   gamma_ref/beta_ref: (TC, 1) float32
    """
    x = x_ref[...].astype(jnp.float32)
    mean = jnp.mean(x, axis=-1, keepdims=True)              # (TN, TC, 1)
    xc = x - mean
    var = jnp.mean(xc * xc, axis=-1, keepdims=True)          # biased variance
    inv = lax.rsqrt(var + _EPS)
    g = gamma_ref[...][None]                                 # (1, TC, 1)
    b = beta_ref[...][None]
    o_ref[...] = (xc * (inv * g) + b).astype(o_ref.dtype)


# ---------------------------------------------------------------------------
# pallas_call wrappers
# ---------------------------------------------------------------------------

def _batch_norm(x, gamma, beta):
    N, C, L = x.shape
    itemsize = jnp.dtype(x.dtype).itemsize
    # One block holds the full (N, L) slab for TC channels.
    # TODO(synk): if N*L per channel exceeds the VMEM block budget, add a
    # split-K two-sweep reduction (accumulate sum/sumsq across an "arbitrary"
    # grid axis) instead of a monolithic per-channel block.
    max_tc = max(1, _BLOCK_BYTES_BUDGET // max(1, N * L * itemsize))
    tc = _pick_tile(C, max_tc, align=8)

    g2 = gamma.reshape(C, 1).astype(jnp.float32)
    b2 = beta.reshape(C, 1).astype(jnp.float32)

    cost = pl.CostEstimate(
        flops=7 * N * C * L,
        transcendentals=C,
        bytes_accessed=2 * N * C * L * itemsize + 2 * C * 4,
    )
    return pl.pallas_call(
        _batch_norm_kernel,
        out_shape=jax.ShapeDtypeStruct((N, C, L), x.dtype),
        grid=(C // tc,),
        in_specs=[
            pl.BlockSpec((N, tc, L), lambda i: (0, i, 0)),
            pl.BlockSpec((tc, 1), lambda i: (i, 0)),
            pl.BlockSpec((tc, 1), lambda i: (i, 0)),
        ],
        out_specs=pl.BlockSpec((N, tc, L), lambda i: (0, i, 0)),
        compiler_params=pltpu.CompilerParams(
            dimension_semantics=("parallel",),
            vmem_limit_bytes=_VMEM_LIMIT_BYTES,
        ),
        cost_estimate=cost,
    )(x, g2, b2)


def _inst_norm(x, gamma, beta):
    N, C, L = x.shape
    itemsize = jnp.dtype(x.dtype).itemsize
    max_tc = max(1, _BLOCK_BYTES_BUDGET // max(1, L * itemsize))
    tc = _pick_tile(C, max_tc, align=8)
    max_tn = max(1, _BLOCK_BYTES_BUDGET // max(1, tc * L * itemsize))
    tn = _pick_tile(N, max_tn, align=1)

    g2 = gamma.reshape(C, 1).astype(jnp.float32)
    b2 = beta.reshape(C, 1).astype(jnp.float32)

    cost = pl.CostEstimate(
        flops=7 * N * C * L,
        transcendentals=N * C,
        bytes_accessed=2 * N * C * L * itemsize + 2 * C * 4,
    )
    return pl.pallas_call(
        _inst_norm_kernel,
        out_shape=jax.ShapeDtypeStruct((N, C, L), x.dtype),
        grid=(N // tn, C // tc),
        in_specs=[
            pl.BlockSpec((tn, tc, L), lambda i, j: (i, j, 0)),
            # gamma/beta: one (C,1) copy in HBM, same channel block reused for
            # every n-tile (no jnp.tile replication).
            pl.BlockSpec((tc, 1), lambda i, j: (j, 0)),
            pl.BlockSpec((tc, 1), lambda i, j: (j, 0)),
        ],
        out_specs=pl.BlockSpec((tn, tc, L), lambda i, j: (i, j, 0)),
        compiler_params=pltpu.CompilerParams(
            dimension_semantics=("parallel", "parallel"),
            vmem_limit_bytes=_VMEM_LIMIT_BYTES,
        ),
        cost_estimate=cost,
    )(x, g2, b2)


@functools.partial(jax.jit, static_argnames=("normalization",))
def normalization_forward(x, gamma, beta, *, normalization):
    """Matches Normalization.forward for a PyTorch-style (N, C, L) input.

    normalization: 'batch' -> nn.BatchNorm1d(C, affine=True), training mode
                   'inst'  -> nn.InstanceNorm1d(C, affine=True)
                   other   -> identity
    """
    if normalization == "batch":
        return _batch_norm(x, gamma, beta)
    if normalization == "inst":
        return _inst_norm(x, gamma, beta)
    return x


# ---------------------------------------------------------------------------
# Pure-JAX reference + self-test
# ---------------------------------------------------------------------------

def _reference(x, gamma, beta, normalization):
    if normalization == "batch":
        mean = jnp.mean(x, axis=(0, 2), keepdims=True)
        var = jnp.mean((x - mean) ** 2, axis=(0, 2), keepdims=True)
        return (x - mean) / jnp.sqrt(var + _EPS) * gamma[None, :, None] + beta[None, :, None]
    if normalization == "inst":
        mean = jnp.mean(x, axis=2, keepdims=True)
        var = jnp.mean((x - mean) ** 2, axis=2, keepdims=True)
        return (x - mean) / jnp.sqrt(var + _EPS) * gamma[None, :, None] + beta[None, :, None]
    return x


if __name__ == "__main__":
    # Small shapes consistent with BatchNorm1d/InstanceNorm1d over embed_dim channels.
    N, C, L = 2, 4, 16  # batch, embed_dim (channels), sequence length
    key = jax.random.PRNGKey(0)
    kx, kg, kb = jax.random.split(key, 3)

    x = jax.random.normal(kx, (N, C, L), dtype=jnp.float32)
    # Deterministic, non-trivial affine parameters (PyTorch init would be ones/zeros).
    gamma = 1.0 + 0.1 * jax.random.normal(kg, (C,), dtype=jnp.float32)
    beta = 0.1 * jax.random.normal(kb, (C,), dtype=jnp.float32)

    ok = True
    for mode in ("batch", "inst", "none"):
        out = normalization_forward(x, gamma, beta, normalization=mode)
        out = jax.block_until_ready(out)
        ref = _reference(x, gamma, beta, mode)
        ok &= bool(jnp.allclose(out, ref, atol=1e-4, rtol=1e-4))

    if ok:
        print("KERNEL_OK")
    else:
        print("KERNEL_MISMATCH")
</pallas_src>

<mosaic_0001>
module attributes {stable_mosaic.version = 11 : i64} {
  func.func @_batch_norm_kernel(%arg0: i32, %arg1: memref<2x4x16xf32, #tpu.memory_space<vmem>>, %arg2: memref<4x1xf32, #tpu.memory_space<vmem>>, %arg3: memref<4x1xf32, #tpu.memory_space<vmem>>, %arg4: memref<2x4x16xf32, #tpu.memory_space<vmem>>) attributes {dimension_semantics = [#tpu.dimension_semantics<parallel>], iteration_bounds = array<i64: 1>, scalar_prefetch = 0 : i64, scratch_operands = 0 : i64, tpu.core_type = #tpu.core_type<tc>, window_params = [{transform_indices = @transform_0, window_bounds = array<i64: 2, 4, 16>}, {transform_indices = @transform_1, window_bounds = array<i64: 4, 1>}, {transform_indices = @transform_2, window_bounds = array<i64: 4, 1>}, {transform_indices = @transform_3, window_bounds = array<i64: 2, 4, 16>}]} {
    %c0 = arith.constant 0 : index
    %c0_0 = arith.constant 0 : index
    %c0_1 = arith.constant 0 : index
    %0 = vector.load %arg1[%c0, %c0_0, %c0_1] : memref<2x4x16xf32, #tpu.memory_space<vmem>>, vector<2x4x16xf32>
    %cst = arith.constant dense<0.000000e+00> : vector<2x4xf32>
    %1 = vector.multi_reduction <add>, %0, %cst [2] : vector<2x4x16xf32> to vector<2x4xf32>
    %2 = vector.shape_cast %1 : vector<2x4xf32> to vector<2x4x1xf32>
    %cst_2 = arith.constant dense<0.000000e+00> : vector<4x1xf32>
    %3 = vector.multi_reduction <add>, %2, %cst_2 [0] : vector<2x4x1xf32> to vector<4x1xf32>
    %4 = vector.shape_cast %3 : vector<4x1xf32> to vector<1x4x1xf32>
    %cst_3 = arith.constant 3.125000e-02 : f32
    %5 = vector.broadcast %cst_3 : f32 to vector<1x4x1xf32>
    %6 = arith.mulf %4, %5 : vector<1x4x1xf32>
    %7 = vector.broadcast %6 : vector<1x4x1xf32> to vector<2x4x16xf32>
    %8 = arith.subf %0, %7 : vector<2x4x16xf32>
    %9 = arith.mulf %8, %8 : vector<2x4x16xf32>
    %cst_4 = arith.constant dense<0.000000e+00> : vector<2x4xf32>
    %10 = vector.multi_reduction <add>, %9, %cst_4 [2] : vector<2x4x16xf32> to vector<2x4xf32>
    %11 = vector.shape_cast %10 : vector<2x4xf32> to vector<2x4x1xf32>
    %cst_5 = arith.constant dense<0.000000e+00> : vector<4x1xf32>
    %12 = vector.multi_reduction <add>, %11, %cst_5 [0] : vector<2x4x1xf32> to vector<4x1xf32>
    %13 = vector.shape_cast %12 : vector<4x1xf32> to vector<1x4x1xf32>
    %cst_6 = arith.constant 3.125000e-02 : f32
    %14 = vector.broadcast %cst_6 : f32 to vector<1x4x1xf32>
    %15 = arith.mulf %13, %14 : vector<1x4x1xf32>
    %cst_7 = arith.constant 9.99999974E-6 : f32
    %16 = vector.broadcast %cst_7 : f32 to vector<1x4x1xf32>
    %17 = arith.addf %15, %16 : vector<1x4x1xf32>
    %18 = math.rsqrt %17 : vector<1x4x1xf32>
    %c0_8 = arith.constant 0 : index
    %c0_9 = arith.constant 0 : index
    %19 = vector.load %arg2[%c0_8, %c0_9] : memref<4x1xf32, #tpu.memory_space<vmem>>, vector<4x1xf32>
    %20 = vector.shape_cast %19 : vector<4x1xf32> to vector<1x4x1xf32>
    %c0_10 = arith.constant 0 : index
    %c0_11 = arith.constant 0 : index
    %21 = vector.load %arg3[%c0_10, %c0_11] : memref<4x1xf32, #tpu.memory_space<vmem>>, vector<4x1xf32>
    %22 = vector.shape_cast %21 : vector<4x1xf32> to vector<1x4x1xf32>
    %23 = arith.mulf %18, %20 : vector<1x4x1xf32>
    %24 = vector.broadcast %23 : vector<1x4x1xf32> to vector<2x4x16xf32>
    %25 = arith.mulf %8, %24 : vector<2x4x16xf32>
    %26 = vector.broadcast %22 : vector<1x4x1xf32> to vector<2x4x16xf32>
    %27 = arith.addf %25, %26 : vector<2x4x16xf32>
    %c0_12 = arith.constant 0 : index
    %c0_13 = arith.constant 0 : index
    %c0_14 = arith.constant 0 : index
    %28 = vector.load %arg4[%c0_12, %c0_13, %c0_14] : memref<2x4x16xf32, #tpu.memory_space<vmem>>, vector<2x4x16xf32>
    tpu.vector_store %arg4[%c0_12, %c0_13, %c0_14], %27 {strides = array<i32>} : memref<2x4x16xf32, #tpu.memory_space<vmem>>, vector<2x4x16xf32>,
    return
  }
  func.func @transform_0(%arg0: i32) -> (i32, i32, i32) {
    %c0_i32 = arith.constant 0 : i32
    %c0_i32_0 = arith.constant 0 : i32
    %c0_i32_1 = arith.constant 0 : i32
    return %c0_i32, %arg0, %c0_i32_0 : i32, i32, i32
  }
  func.func @transform_1(%arg0: i32) -> (i32, i32) {
    %c0_i32 = arith.constant 0 : i32
    %c0_i32_0 = arith.constant 0 : i32
    return %arg0, %c0_i32 : i32, i32
  }
  func.func @transform_2(%arg0: i32) -> (i32, i32) {
    %c0_i32 = arith.constant 0 : i32
    %c0_i32_0 = arith.constant 0 : i32
    return %arg0, %c0_i32 : i32, i32
  }
  func.func @transform_3(%arg0: i32) -> (i32, i32, i32) {
    %c0_i32 = arith.constant 0 : i32
    %c0_i32_0 = arith.constant 0 : i32
    %c0_i32_1 = arith.constant 0 : i32
    return %c0_i32, %arg0, %c0_i32_0 : i32, i32, i32
  }
}

</mosaic_0001>

<llo_original>
// kernel: normalization_forward.1
$region0: #{normalization_forward.1}
  #allocation0 [shape = 'u32[]', space=smem, size = 0x4, offset = 0x4, fixed_abs, tag = 'smem constant byte address 0x4 - core index']
  #allocation1 [shape = 'u32[144,128]{1,0:T(1,128)}', space=vmem, size = 0x12000, scoped, tag = 'internal scratch']
  %s0 = inlined_call_operand.vmem [shape: f32[2,4,16], index: 0, kind: input, shape index: {}]
  %s1 = inlined_call_operand.vmem [shape: f32[4,1], index: 1, kind: input, shape index: {}]
  %s2 = inlined_call_operand.vmem [shape: f32[4,1], index: 2, kind: input, shape index: {}]
  %s3 = inlined_call_operand.hbm [shape: f32[2,4,16], index: 3, kind: output, shape index: {}]
  %s4 = sld [smem:[#allocation0]]
  $region22: #{normalization_forward.1} parent=0
    _
  %s6 = ssub.s32 1, %s4
  %s7 = scalar_select 0, %s6, %s4
  $region1: #{normalization_forward.1} parent=0
    #allocation2 [shape = 'u8[4096]{0}', space=vmem, size = 0x1000, scoped, tag = 'output window, operand 0, single buffered']
    #allocation3 [shape = 's32[1]{0}', space=sflag, size = 0x4, scoped, tag = 'scoped memory for normalization_forward.1']
    %8 = vsyncpa [#allocation3], 0
    // Predicated region
    $region2: #{normalization_forward.1} parent=1 // pred_check
      _
    $region3: #{normalization_forward.1} parent=1 // pred_check_branch
      %10 = sbr.rel (0) target = $region5
    $region4: #{normalization_forward.1} parent=1 // pred_region
      _
    $region5: #{normalization_forward.1} parent=1 // pred_fallthru
      _
    // Predicated region
    $region6: #{normalization_forward.1} parent=1 // pred_check
      _
    $region7: #{normalization_forward.1} parent=1 // pred_check_branch
      %12 = sbr.rel (0) target = $region9
    $region8: #{normalization_forward.1} parent=1 // pred_region
      _
    $region9: #{normalization_forward.1} parent=1 // pred_fallthru
      _
    // Predicated region
    $region10: #{normalization_forward.1} parent=1 // pred_check
      _
    $region11: #{normalization_forward.1} parent=1 // pred_check_branch
      %14 = sbr.rel (0) target = $region13
    $region12: #{normalization_forward.1} parent=1 // pred_region
      _
    $region13: #{normalization_forward.1} parent=1 // pred_fallthru
      _
    %v15 = vld [vmem:[%s0] sm:$0xf]
    %v16 = vld [vmem:[%s0 + $0x4] sm:$0xf]
    %vm17 = vcmask 125952
    %v18 = vsel %vm17, %v15, 0.0
    %19 = vadd.xlane.f32.xlu0 %v18
    %v20 = vpop.xlane.xlu0 %19
    %v21 = vsel %vm17, %v16, 0.0
    %22 = vadd.xlane.f32.xlu0 %v21
    %v23 = vpop.xlane.xlu0 %22
    %vm24 = vcmask 1043456
    %v25 = vsel %vm24, %v20, 0.0
    %v26 = vsel %vm24, %v23, 0.0
    %v27 = vadd.f32 %v25, %v26
    %v28 = vmul.f32 %v27, 0.03125
    %v29 = vsub.f32 %v15, %v28
    %v30 = vsub.f32 %v16, %v28
    %v31 = vmul.f32 %v29, %v29
    %v32 = vmul.f32 %v30, %v30
    %v33 = vsel %vm17, %v31, 0.0
    %34 = vadd.xlane.f32.xlu0 %v33
    %v35 = vpop.xlane.xlu0 %34
    %v36 = vsel %vm17, %v32, 0.0
    %37 = vadd.xlane.f32.xlu0 %v36
    %v38 = vpop.xlane.xlu0 %37
    %v39 = vsel %vm24, %v35, 0.0
    %v40 = vsel %vm24, %v38, 0.0
    %v41 = vadd.f32 %v39, %v40
    %v42 = vmul.f32 %v41, 0.03125
    %v43 = vadd.f32 %v42, 1e-05
    %v44 = vrsqrt.pop %v43
    %v45 = vld [vmem:[%s1] sm:$0xf]
    %v46 = vld [vmem:[%s2] sm:$0xf]
    %v47 = vmul.f32 %v44, %v45
    %49 = vset.pattern.permute.xlu0 0
    %50 = vperm.xlu0 %49, %v47
    %v51 = vpop.permute.xlu0 %50
    %v53 = vmul.f32 %v29, %v51
    %v54 = vmul.f32 %v30, %v51
    %56 = vset.pattern.permute.xlu0 0
    %57 = vperm.xlu0 %56, %v46
    %v58 = vpop.permute.xlu0 %57
    %v60 = vadd.f32 %v53, %v58
    %v61 = vadd.f32 %v54, %v58
    %62 = vst.msk [vmem:[#allocation2] sm:$0xf] %vm17, %v60
    %63 = vst.msk [vmem:[#allocation2 + $0x4] sm:$0xf] %vm17, %v61
    // Predicated region
    $region14: #{normalization_forward.1} parent=1 // pred_check
      _
    $region15: #{normalization_forward.1} parent=1 // pred_check_branch
      %65 = sbr.rel (0) target = $region17
    $region16: #{normalization_forward.1} parent=1 // pred_region
      %s67 = ssub.s32 128, 128
      %68 = vsyncadd [#allocation3], %s67
      %s69 = sshll.u32 [#allocation2], 4
      %s70 = int_to_ptr.vmem [resolvable:$true] %s69
      %75 = dma.vmem_to_hbm [thread:$0]  %s70, 128, %s3, [#allocation3], 64, 64, 4
    $region17: #{normalization_forward.1} parent=1 // pred_fallthru
      _
    // Predicated region
    $region18: #{normalization_forward.1} parent=1 // pred_check
      _
    $region19: #{normalization_forward.1} parent=1 // pred_check_branch
      %77 = sbr.rel (0) target = $region21
    $region20: #{normalization_forward.1} parent=1 // pred_region
      %78 = dma.done [#allocation3], 128
    $region21: #{normalization_forward.1} parent=1 // pred_fallthru
      _
    %79 = vsyncpa [#allocation3], 1

</llo_original>
